<compile_context>
chip_gen: v6e
topology: v6e:2x2x1
jax: 0.10.0
libtpu: 0.0.40
codegen_flags: <defaults>
</compile_context>

<pallas_src>
import functools

import jax
import jax.numpy as jnp
from jax import lax
from jax.experimental import pallas as pl
from jax.experimental.pallas import tpu as pltpu


# ---------------------------------------------------------------------------
# Fused cross-attention kernel: one grid step covers all batches (row-stacked).
# ---------------------------------------------------------------------------
def _cross_attn_kernel(x1_ref, x2_ref, wq_ref, wk_ref, wvp_ref, b_ref, o_ref):
    Bt, N, Cp = x1_ref.shape          # batches in this step, seq len, padded C
    H = wk_ref.shape[0]               # num_heads
    R = Bt * N                        # stacked rows for the projections

    x1 = x1_ref[...]                                  # (Bt, N, Cp) f32 (residual kept f32)
    x1f = x1.reshape(R, Cp).astype(jnp.bfloat16)      # bf16 operands for the MXU
    x2f = x2_ref[...].reshape(R, Cp).astype(jnp.bfloat16)

    # Row-stacked query projection (softmax scale already folded into wq).
    q = jnp.dot(x2f, wq_ref[...], preferred_element_type=jnp.float32)   # (R, Cp) f32
    q3 = q.reshape(Bt, N, Cp).astype(jnp.bfloat16)                      # (Bt, N, Cp)

    def head_body(h, acc):
        # wk[h]  : key weights with every column outside head h zeroed
        #          -> full-lane contraction gives exactly q_h @ k_h^T.
        # wvp[h] : value proj folded with the matching slice of the output
        #          proj -> head output lands directly in the full C space,
        #          no lane slicing and no concat.
        k = jnp.dot(x1f, wk_ref[h], preferred_element_type=jnp.float32)    # (R, Cp)
        vp = jnp.dot(x1f, wvp_ref[h], preferred_element_type=jnp.float32)  # (R, Cp)
        k3 = k.reshape(Bt, N, Cp).astype(jnp.bfloat16)
        vp3 = vp.reshape(Bt, N, Cp).astype(jnp.bfloat16)

        s = jnp.einsum('bnc,bmc->bnm', q3, k3,
                       preferred_element_type=jnp.float32)                 # (Bt, N, N)
        s = s - jnp.max(s, axis=-1, keepdims=True)                         # f32 stats
        e = jnp.exp(s)
        p = e * pl.reciprocal(jnp.sum(e, axis=-1, keepdims=True), approx=True)

        return acc + jnp.einsum('bnm,bmc->bnc', p.astype(jnp.bfloat16), vp3,
                                preferred_element_type=jnp.float32)

    acc = lax.fori_loop(0, H, head_body,
                        jnp.zeros((Bt, N, Cp), jnp.float32))               # (Bt, N, Cp)

    # proj bias + residual (both f32, padded lanes stay exactly zero).
    o_ref[...] = (acc + b_ref[...] + x1).astype(o_ref.dtype)


# ---------------------------------------------------------------------------
# One-time parameter packing (outside the jitted forward path).
# ---------------------------------------------------------------------------
def pack_params(params, *, num_heads, lane=128):
    """Slice/transpose/fold/pad the PyTorch-layout weights once."""
    qkv1_w, qkv2_w, proj_w, proj_b = params            # PyTorch (out, in) layout
    C = proj_w.shape[0]
    assert C % num_heads == 0, "dim should be divisible by num_heads"
    D = C // num_heads
    Cp = ((C + lane - 1) // lane) * lane
    scale = float(D) ** -0.5

    wq = qkv2_w[0 * C:1 * C, :].T * scale               # (C, C) query  <- x2, scale folded
    wk = qkv1_w[1 * C:2 * C, :].T                       # (C, C) key    <- x1
    wv = qkv1_w[2 * C:3 * C, :].T                       # (C, C) value  <- x1
    wp = proj_w.T                                       # (C, C)

    # Per-head key weights: zero every output column not belonging to head h.
    col_head = jnp.arange(C) // D                                           # (C,)
    head_mask = (col_head[None, :] == jnp.arange(num_heads)[:, None])       # (H, C)
    wk_stack = wk[None, :, :] * head_mask[:, None, :].astype(wk.dtype)      # (H, C, C)

    # Fold per-head value projection with the matching output-projection rows.
    wv_h = wv.reshape(C, num_heads, D).transpose(1, 0, 2)                   # (H, C, D)
    wp_h = wp.reshape(num_heads, D, C)                                      # (H, D, C)
    wvp_stack = jnp.einsum('hcd,hde->hce', wv_h, wp_h)                      # (H, C, C)

    pad2 = lambda w: jnp.pad(w, [(0, 0)] * (w.ndim - 2)
                             + [(0, Cp - C), (0, Cp - C)])
    wq_p = pad2(wq).astype(jnp.bfloat16)                                    # (Cp, Cp)
    wk_p = pad2(wk_stack).astype(jnp.bfloat16)                              # (H, Cp, Cp)
    wvp_p = pad2(wvp_stack).astype(jnp.bfloat16)                            # (H, Cp, Cp)
    bias_p = jnp.pad(proj_b, (0, Cp - C)).reshape(1, 1, Cp).astype(jnp.float32)
    return wq_p, wk_p, wvp_p, bias_p


# ---------------------------------------------------------------------------
# Forward wrapper (jit-able; only cheap pad/slice layout plumbing around the
# single fused pallas_call).
# ---------------------------------------------------------------------------
def cross_attention_forward(x1, x2, packed):
    wq, wk_stack, wvp_stack, bias = packed
    B, N, C = x1.shape
    Cp = wq.shape[-1]
    H = wk_stack.shape[0]

    # Lane-dense activations: zero-pad channel dim to the 128-lane boundary.
    x1p = jnp.pad(x1, ((0, 0), (0, 0), (0, Cp - C)))
    x2p = jnp.pad(x2, ((0, 0), (0, 0), (0, Cp - C)))

    # One grid step covers all batches (B*N rows stacked for the MXU).  For
    # large B one would tile the batch axis here and mark it "parallel".
    grid = (1,)
    seq_spec = pl.BlockSpec((B, N, Cp), lambda i: (0, 0, 0))
    wq_spec = pl.BlockSpec((Cp, Cp), lambda i: (0, 0))
    wstack_spec = pl.BlockSpec((H, Cp, Cp), lambda i: (0, 0, 0))
    bias_spec = pl.BlockSpec((1, 1, Cp), lambda i: (0, 0, 0))

    R = B * N
    flops = 2 * R * Cp * Cp * (1 + 2 * H) + 4 * H * B * N * N * Cp
    transcendentals = H * B * N * N + H * B * N
    bytes_accessed = (x1p.size * 4 + x2p.size * 4
                      + (wq.size + wk_stack.size + wvp_stack.size) * 2
                      + bias.size * 4 + B * N * Cp * 4)

    out_p = pl.pallas_call(
        _cross_attn_kernel,
        out_shape=jax.ShapeDtypeStruct((B, N, Cp), x1.dtype),
        grid=grid,
        in_specs=[seq_spec, seq_spec, wq_spec, wstack_spec, wstack_spec,
                  bias_spec],
        out_specs=seq_spec,
        compiler_params=pltpu.CompilerParams(
            dimension_semantics=("parallel",)),
        cost_estimate=pl.CostEstimate(flops=flops,
                                      transcendentals=transcendentals,
                                      bytes_accessed=bytes_accessed),
    )(x1p, x2p, wq, wk_stack, wvp_stack, bias)

    return out_p[..., :C]   # drop the zero lane padding


# ---------------------------------------------------------------------------
# Pure-JAX reference (mirrors the PyTorch module exactly, f32).
# ---------------------------------------------------------------------------
def cross_attention_ref(x1, x2, params, *, num_heads):
    B, N, C = x1.shape
    D = C // num_heads
    scale = float(D) ** -0.5
    qkv1_w, qkv2_w, proj_w, proj_b = params
    qkv1 = x1 @ qkv1_w.T
    qkv2 = x2 @ qkv2_w.T
    k = qkv1[..., C:2 * C].reshape(B, N, num_heads, D).transpose(0, 2, 1, 3)
    v = qkv1[..., 2 * C:3 * C].reshape(B, N, num_heads, D).transpose(0, 2, 1, 3)
    q = qkv2[..., 0:C].reshape(B, N, num_heads, D).transpose(0, 2, 1, 3)
    attn = jax.nn.softmax((q @ k.transpose(0, 1, 3, 2)) * scale, axis=-1)
    out = (attn @ v).transpose(0, 2, 1, 3).reshape(B, N, C)
    out = out @ proj_w.T + proj_b
    return out + x1


def init_params(key, C):
    k1, k2, k3, k4 = jax.random.split(key, 4)
    qkv1_w = 0.1 * jax.random.normal(k1, (3 * C, C), jnp.float32)  # bias=False
    qkv2_w = 0.1 * jax.random.normal(k2, (3 * C, C), jnp.float32)  # bias=False
    proj_w = 0.1 * jax.random.normal(k3, (C, C), jnp.float32)
    proj_b = 0.1 * jax.random.normal(k4, (C,), jnp.float32)
    return qkv1_w, qkv2_w, proj_w, proj_b


if __name__ == "__main__":
    key = jax.random.PRNGKey(0)
    kx1, kx2, kp = jax.random.split(key, 3)

    # Module defaults: num_heads=5, so dim must be a multiple of 5.
    B, N, num_heads, head_dim = 2, 8, 5, 8
    C = num_heads * head_dim                           # dim = 40

    x1 = jax.random.normal(kx1, (B, N, C), jnp.float32)
    x2 = jax.random.normal(kx2, (B, N, C), jnp.float32)
    params = init_params(kp, C)

    packed = pack_params(params, num_heads=num_heads)  # one-time weight prep
    fwd = jax.jit(cross_attention_forward)
    out = fwd(x1, x2, packed)
    jax.block_until_ready(out)

    ref = cross_attention_ref(x1, x2, params, num_heads=num_heads)
    assert out.shape == (B, N, C)
    max_err = float(jnp.max(jnp.abs(out - ref)))
    # bf16 MXU operands with f32 accumulation -> loose-ish tolerance vs f32 ref
    assert max_err < 5e-2, max_err
    print("KERNEL_OK")
</pallas_src>

<mosaic_0001>
module attributes {stable_mosaic.version = 11 : i64} {
  func.func @_cross_attn_kernel(%arg0: i32, %arg1: memref<2x8x128xf32, #tpu.memory_space<vmem>>, %arg2: memref<2x8x128xf32, #tpu.memory_space<vmem>>, %arg3: memref<128x128xbf16, #tpu.memory_space<vmem>>, %arg4: memref<5x128x128xbf16, #tpu.memory_space<vmem>>, %arg5: memref<5x128x128xbf16, #tpu.memory_space<vmem>>, %arg6: memref<1x1x128xf32, #tpu.memory_space<vmem>>, %arg7: memref<2x8x128xf32, #tpu.memory_space<vmem>>) attributes {dimension_semantics = [#tpu.dimension_semantics<parallel>], iteration_bounds = array<i64: 1>, scalar_prefetch = 0 : i64, scratch_operands = 0 : i64, tpu.core_type = #tpu.core_type<tc>, window_params = [{pipeline_mode = #tpu.pipeline_mode<synchronous>, transform_indices = @transform_0, window_bounds = array<i64: 2, 8, 128>}, {pipeline_mode = #tpu.pipeline_mode<synchronous>, transform_indices = @transform_1, window_bounds = array<i64: 2, 8, 128>}, {pipeline_mode = #tpu.pipeline_mode<synchronous>, transform_indices = @transform_2, window_bounds = array<i64: 128, 128>}, {pipeline_mode = #tpu.pipeline_mode<synchronous>, transform_indices = @transform_3, window_bounds = array<i64: 5, 128, 128>}, {pipeline_mode = #tpu.pipeline_mode<synchronous>, transform_indices = @transform_4, window_bounds = array<i64: 5, 128, 128>}, {pipeline_mode = #tpu.pipeline_mode<synchronous>, transform_indices = @transform_5, window_bounds = array<i64: 1, 1, 128>}, {pipeline_mode = #tpu.pipeline_mode<synchronous>, transform_indices = @transform_6, window_bounds = array<i64: 2, 8, 128>}]} {
    %c0 = arith.constant 0 : index
    %c0_0 = arith.constant 0 : index
    %c0_1 = arith.constant 0 : index
    %0 = vector.load %arg1[%c0, %c0_0, %c0_1] : memref<2x8x128xf32, #tpu.memory_space<vmem>>, vector<2x8x128xf32>
    %1 = vector.shape_cast %0 : vector<2x8x128xf32> to vector<16x128xf32>
    %2 = arith.truncf %1 : vector<16x128xf32> to vector<16x128xbf16>
    %c0_2 = arith.constant 0 : index
    %c0_3 = arith.constant 0 : index
    %c0_4 = arith.constant 0 : index
    %3 = vector.load %arg2[%c0_2, %c0_3, %c0_4] : memref<2x8x128xf32, #tpu.memory_space<vmem>>, vector<2x8x128xf32>
    %4 = vector.shape_cast %3 : vector<2x8x128xf32> to vector<16x128xf32>
    %5 = arith.truncf %4 : vector<16x128xf32> to vector<16x128xbf16>
    %c0_5 = arith.constant 0 : index
    %c0_6 = arith.constant 0 : index
    %6 = vector.load %arg3[%c0_5, %c0_6] : memref<128x128xbf16, #tpu.memory_space<vmem>>, vector<128x128xbf16>
    %cst = arith.constant dense<0.000000e+00> : vector<16x128xf32>
    %7 = tpu.matmul %5, %6, %cst {dimension_numbers = #tpu.dot_dimension_numbers<[1], [0], [0], [1], [0, 0, 1, 1], [], []>} : vector<16x128xbf16>, vector<128x128xbf16>, vector<16x128xf32> -> vector<16x128xf32>
    %8 = vector.shape_cast %7 : vector<16x128xf32> to vector<2x8x128xf32>
    %9 = arith.truncf %8 : vector<2x8x128xf32> to vector<2x8x128xbf16>
    %cst_7 = arith.constant 0.000000e+00 : f32
    %10 = vector.broadcast %cst_7 : f32 to vector<2x8x128xf32>
    %c0_i32 = arith.constant 0 : i32
    %c5_i32 = arith.constant 5 : i32
    %11 = arith.addi %c0_i32, %c5_i32 : i32
    %c1_i32 = arith.constant 1 : i32
    %12 = scf.for %arg8 = %c0_i32 to %11 step %c1_i32 iter_args(%arg9 = %10) -> (vector<2x8x128xf32>)  : i32 {
      %18 = arith.index_cast %arg8 : i32 to index
      %c0_15 = arith.constant 0 : index
      %c0_16 = arith.constant 0 : index
      %19 = vector.load %arg4[%18, %c0_15, %c0_16] : memref<5x128x128xbf16, #tpu.memory_space<vmem>>, vector<1x128x128xbf16>
      %20 = vector.shape_cast %19 : vector<1x128x128xbf16> to vector<128x128xbf16>
      %cst_17 = arith.constant dense<0.000000e+00> : vector<16x128xf32>
      %21 = tpu.matmul %2, %20, %cst_17 {dimension_numbers = #tpu.dot_dimension_numbers<[1], [0], [0], [1], [0, 0, 1, 1], [], []>} : vector<16x128xbf16>, vector<128x128xbf16>, vector<16x128xf32> -> vector<16x128xf32>
      %22 = arith.index_cast %arg8 : i32 to index
      %c0_18 = arith.constant 0 : index
      %c0_19 = arith.constant 0 : index
      %23 = vector.load %arg5[%22, %c0_18, %c0_19] : memref<5x128x128xbf16, #tpu.memory_space<vmem>>, vector<1x128x128xbf16>
      %24 = vector.shape_cast %23 : vector<1x128x128xbf16> to vector<128x128xbf16>
      %cst_20 = arith.constant dense<0.000000e+00> : vector<16x128xf32>
      %25 = tpu.matmul %2, %24, %cst_20 {dimension_numbers = #tpu.dot_dimension_numbers<[1], [0], [0], [1], [0, 0, 1, 1], [], []>} : vector<16x128xbf16>, vector<128x128xbf16>, vector<16x128xf32> -> vector<16x128xf32>
      %26 = vector.shape_cast %21 : vector<16x128xf32> to vector<2x8x128xf32>
      %27 = arith.truncf %26 : vector<2x8x128xf32> to vector<2x8x128xbf16>
      %28 = vector.shape_cast %25 : vector<16x128xf32> to vector<2x8x128xf32>
      %29 = arith.truncf %28 : vector<2x8x128xf32> to vector<2x8x128xbf16>
      "tpu.trace_start"() <{level = 10 : i32, message = "bnc,bmc->bnm"}> : () -> ()
      %cst_21 = arith.constant dense<0.000000e+00> : vector<2x8x8xf32>
      %30 = tpu.matmul %9, %27, %cst_21 {dimension_numbers = #tpu.dot_dimension_numbers<[2], [2], [1], [1], [0, 0, 0, 1, 1, 1], [0], [0]>} : vector<2x8x128xbf16>, vector<2x8x128xbf16>, vector<2x8x8xf32> -> vector<2x8x8xf32>
      "tpu.trace_stop"() : () -> ()
      %cst_22 = arith.constant dense<0xFF800000> : vector<2x8xf32>
      %31 = vector.multi_reduction <maximumf>, %30, %cst_22 [2] : vector<2x8x8xf32> to vector<2x8xf32>
      %32 = vector.shape_cast %31 : vector<2x8xf32> to vector<2x8x1xf32>
      %33 = vector.broadcast %32 : vector<2x8x1xf32> to vector<2x8x8xf32>
      %34 = arith.subf %30, %33 : vector<2x8x8xf32>
      %35 = math.exp %34 : vector<2x8x8xf32>
      %cst_23 = arith.constant dense<0.000000e+00> : vector<2x8xf32>
      %36 = vector.multi_reduction <add>, %35, %cst_23 [2] : vector<2x8x8xf32> to vector<2x8xf32>
      %37 = vector.shape_cast %36 : vector<2x8xf32> to vector<2x8x1xf32>
      %38 = tpu.reciprocal %37 {approx = true} : vector<2x8x1xf32> -> vector<2x8x1xf32>
      %39 = vector.broadcast %38 : vector<2x8x1xf32> to vector<2x8x8xf32>
      %40 = arith.mulf %35, %39 : vector<2x8x8xf32>
      %41 = arith.truncf %40 : vector<2x8x8xf32> to vector<2x8x8xbf16>
      "tpu.trace_start"() <{level = 10 : i32, message = "bnm,bmc->bnc"}> : () -> ()
      %cst_24 = arith.constant dense<0.000000e+00> : vector<2x8x128xf32>
      %42 = tpu.matmul %41, %29, %cst_24 {dimension_numbers = #tpu.dot_dimension_numbers<[2], [1], [1], [2], [0, 0, 0, 1, 1, 2], [0], [0]>} : vector<2x8x8xbf16>, vector<2x8x128xbf16>, vector<2x8x128xf32> -> vector<2x8x128xf32>
      "tpu.trace_stop"() : () -> ()
      %43 = arith.addf %arg9, %42 : vector<2x8x128xf32>
      scf.yield %43 : vector<2x8x128xf32>
    }
    %c5_i32_8 = arith.constant 5 : i32
    %c0_9 = arith.constant 0 : index
    %c0_10 = arith.constant 0 : index
    %c0_11 = arith.constant 0 : index
    %13 = vector.load %arg6[%c0_9, %c0_10, %c0_11] : memref<1x1x128xf32, #tpu.memory_space<vmem>>, vector<1x1x128xf32>
    %14 = vector.broadcast %13 : vector<1x1x128xf32> to vector<2x8x128xf32>
    %15 = arith.addf %12, %14 : vector<2x8x128xf32>
    %16 = arith.addf %15, %0 : vector<2x8x128xf32>
    %c0_12 = arith.constant 0 : index
    %c0_13 = arith.constant 0 : index
    %c0_14 = arith.constant 0 : index
    %17 = vector.load %arg7[%c0_12, %c0_13, %c0_14] : memref<2x8x128xf32, #tpu.memory_space<vmem>>, vector<2x8x128xf32>
    tpu.vector_store %arg7[%c0_12, %c0_13, %c0_14], %16 {strides = array<i32>} : memref<2x8x128xf32, #tpu.memory_space<vmem>>, vector<2x8x128xf32>,
    return
  }
  func.func @transform_0(%arg0: i32) -> (i32, i32, i32) {
    %c0_i32 = arith.constant 0 : i32
    %c0_i32_0 = arith.constant 0 : i32
    %c0_i32_1 = arith.constant 0 : i32
    %c0_i32_2 = arith.constant 0 : i32
    return %c0_i32, %c0_i32_0, %c0_i32_1 : i32, i32, i32
  }
  func.func @transform_1(%arg0: i32) -> (i32, i32, i32) {
    %c0_i32 = arith.constant 0 : i32
    %c0_i32_0 = arith.constant 0 : i32
    %c0_i32_1 = arith.constant 0 : i32
    %c0_i32_2 = arith.constant 0 : i32
    return %c0_i32, %c0_i32_0, %c0_i32_1 : i32, i32, i32
  }
  func.func @transform_2(%arg0: i32) -> (i32, i32) {
    %c0_i32 = arith.constant 0 : i32
    %c0_i32_0 = arith.constant 0 : i32
    %c0_i32_1 = arith.constant 0 : i32
    return %c0_i32, %c0_i32_0 : i32, i32
  }
  func.func @transform_3(%arg0: i32) -> (i32, i32, i32) {
    %c0_i32 = arith.constant 0 : i32
    %c0_i32_0 = arith.constant 0 : i32
    %c0_i32_1 = arith.constant 0 : i32
    %c0_i32_2 = arith.constant 0 : i32
    return %c0_i32, %c0_i32_0, %c0_i32_1 : i32, i32, i32
  }
  func.func @transform_4(%arg0: i32) -> (i32, i32, i32) {
    %c0_i32 = arith.constant 0 : i32
    %c0_i32_0 = arith.constant 0 : i32
    %c0_i32_1 = arith.constant 0 : i32
    %c0_i32_2 = arith.constant 0 : i32
    return %c0_i32, %c0_i32_0, %c0_i32_1 : i32, i32, i32
  }
  func.func @transform_5(%arg0: i32) -> (i32, i32, i32) {
    %c0_i32 = arith.constant 0 : i32
    %c0_i32_0 = arith.constant 0 : i32
    %c0_i32_1 = arith.constant 0 : i32
    %c0_i32_2 = arith.constant 0 : i32
    return %c0_i32, %c0_i32_0, %c0_i32_1 : i32, i32, i32
  }
  func.func @transform_6(%arg0: i32) -> (i32, i32, i32) {
    %c0_i32 = arith.constant 0 : i32
    %c0_i32_0 = arith.constant 0 : i32
    %c0_i32_1 = arith.constant 0 : i32
    %c0_i32_2 = arith.constant 0 : i32
    return %c0_i32, %c0_i32_0, %c0_i32_1 : i32, i32, i32
  }
}

</mosaic_0001>

<llo_original>
// kernel: cross_attention_forward.1
$region0: #{cross_attention_forward.1}
  #allocation0 [shape = 'u32[]', space=smem, size = 0x4, offset = 0x4, fixed_abs, tag = 'smem constant byte address 0x4 - core index']
  #allocation1 [shape = 'u32[144,128]{1,0:T(1,128)}', space=vmem, size = 0x12000, scoped, tag = 'internal scratch']
  %s0 = inlined_call_operand.vmem [shape: f32[2,8,128], index: 0, kind: input, shape index: {}]
  %s1 = inlined_call_operand.vmem [shape: f32[2,8,128], index: 1, kind: input, shape index: {}]
  %s2 = inlined_call_operand.vmem [shape: bf16[128,128], index: 2, kind: input, shape index: {}]
  %s3 = inlined_call_operand.hbm [shape: bf16[5,128,128], index: 3, kind: input, shape index: {}]
  %s4 = inlined_call_operand.hbm [shape: bf16[5,128,128], index: 4, kind: input, shape index: {}]
  %s5 = inlined_call_operand.vmem [shape: f32[1,1,128], index: 5, kind: input, shape index: {}]
  %s6 = inlined_call_operand.hbm [shape: f32[2,8,128], index: 6, kind: output, shape index: {}]
  %s7 = sld [smem:[#allocation0]]
  $region49: #{cross_attention_forward.1} parent=0
    _
  %s9 = ssub.s32 1, %s7
  %s10 = scalar_select 0, %s9, %s7
  $region1: #{cross_attention_forward.1} parent=0
    #allocation2 [shape = 'u8[163840]{0}', space=vmem, size = 0x28000, scoped, tag = 'input window, operand 3, single buffered']
    #allocation3 [shape = 's32[1]{0}', space=sflag, size = 0x4, scoped, tag = 'scoped memory for cross_attention_forward.1']
    #allocation4 [shape = 's32[1]{0}', space=sflag, size = 0x4, scoped, tag = 'scoped memory for cross_attention_forward.1']
    #allocation5 [shape = 'u8[163840]{0}', space=vmem, size = 0x28000, scoped, tag = 'input window, operand 4, single buffered']
    #allocation6 [shape = 's32[1]{0}', space=sflag, size = 0x4, scoped, tag = 'scoped memory for cross_attention_forward.1']
    #allocation7 [shape = 'u8[8192]{0}', space=vmem, size = 0x2000, scoped, tag = 'output window, operand 0, single buffered']
    %11 = vsyncpa [#allocation3], 0
    %12 = vsyncpa [#allocation6], 0
    %13 = vsyncpa [#allocation4], 0
    // Predicated region
    $region2: #{cross_attention_forward.1} parent=1 // pred_check
      _
    $region3: #{cross_attention_forward.1} parent=1 // pred_check_branch
      %15 = sbr.rel (0) target = $region5
    $region4: #{cross_attention_forward.1} parent=1 // pred_region
      _
    $region5: #{cross_attention_forward.1} parent=1 // pred_fallthru
      _
    // Predicated region
    $region6: #{cross_attention_forward.1} parent=1 // pred_check
      _
    $region7: #{cross_attention_forward.1} parent=1 // pred_check_branch
      %17 = sbr.rel (0) target = $region9
    $region8: #{cross_attention_forward.1} parent=1 // pred_region
      _
    $region9: #{cross_attention_forward.1} parent=1 // pred_fallthru
      _
    // Predicated region
    $region10: #{cross_attention_forward.1} parent=1 // pred_check
      _
    $region11: #{cross_attention_forward.1} parent=1 // pred_check_branch
      %19 = sbr.rel (0) target = $region13
    $region12: #{cross_attention_forward.1} parent=1 // pred_region
      _
    $region13: #{cross_attention_forward.1} parent=1 // pred_fallthru
      _
    // Predicated region
    $region14: #{cross_attention_forward.1} parent=1 // pred_check
      _
    $region15: #{cross_attention_forward.1} parent=1 // pred_check_branch
      %21 = sbr.rel (0) target = $region17
    $region16: #{cross_attention_forward.1} parent=1 // pred_region
      %s23 = ssub.s32 5120, 5120
      %24 = vsyncadd [#allocation3], %s23
      %s25 = sshll.u32 [#allocation2], 4
      %s26 = int_to_ptr.vmem [resolvable:$true] %s25
      %31 = dma.hbm_to_vmem [thread:$0]  %s3, 5120, %s26, [#allocation3], 64, 64, 4
    $region17: #{cross_attention_forward.1} parent=1 // pred_fallthru
      _
    // Predicated region
    $region18: #{cross_attention_forward.1} parent=1 // pred_check
      _
    $region19: #{cross_attention_forward.1} parent=1 // pred_check_branch
      %33 = sbr.rel (0) target = $region21
    $region20: #{cross_attention_forward.1} parent=1 // pred_region
      %s35 = ssub.s32 5120, 5120
      %36 = vsyncadd [#allocation6], %s35
      %s37 = sshll.u32 [#allocation5], 4
      %s38 = int_to_ptr.vmem [resolvable:$true] %s37
      %43 = dma.hbm_to_vmem [thread:$0]  %s4, 5120, %s38, [#allocation6], 64, 64, 4
    $region21: #{cross_attention_forward.1} parent=1 // pred_fallthru
      _
    // Predicated region
    $region22: #{cross_attention_forward.1} parent=1 // pred_check
      _
    $region23: #{cross_attention_forward.1} parent=1 // pred_check_branch
      %45 = sbr.rel (0) target = $region25
    $region24: #{cross_attention_forward.1} parent=1 // pred_region
      _
    $region25: #{cross_attention_forward.1} parent=1 // pred_fallthru
      _
    // Predicated region
    $region26: #{cross_attention_forward.1} parent=1 // pred_check
      _
    $region27: #{cross_attention_forward.1} parent=1 // pred_check_branch
      %47 = sbr.rel (0) target = $region29
    $region28: #{cross_attention_forward.1} parent=1 // pred_region
      %48 = dma.done [#allocation3], 5120
    $region29: #{cross_attention_forward.1} parent=1 // pred_fallthru
      _
    // Predicated region
    $region30: #{cross_attention_forward.1} parent=1 // pred_check
      _
    $region31: #{cross_attention_forward.1} parent=1 // pred_check_branch
      %50 = sbr.rel (0) target = $region33
    $region32: #{cross_attention_forward.1} parent=1 // pred_region
      %51 = dma.done [#allocation6], 5120
    $region33: #{cross_attention_forward.1} parent=1 // pred_fallthru
      _
    %v53 = vld [vmem:[%s0] sm:$0xff]
    %v54 = vld [vmem:[%s0 + $0x8] sm:$0xff]
    %v55 = vpack.c.bf16 %v54, %v53
    %v56 = vld [vmem:[%s1] sm:$0xff]
    %v57 = vld [vmem:[%s1 + $0x8] sm:$0xff]
    %v58 = vpack.c.bf16 %v57, %v56
    %v59 = vld [vmem:[%s2] sm:$0xf]
    %v60 = vld [vmem:[%s2 + $0x4] sm:$0xf]
    %v61 = vld [vmem:[%s2 + $0x8] sm:$0xf]
    %v62 = vld [vmem:[%s2 + $0xc] sm:$0xf]
    %v63 = vld [vmem:[%s2 + $0x10] sm:$0xf]
    %v64 = vld [vmem:[%s2 + $0x14] sm:$0xf]
    %v65 = vld [vmem:[%s2 + $0x18] sm:$0xf]
    %v66 = vld [vmem:[%s2 + $0x1c] sm:$0xf]
    %v67 = vld [vmem:[%s2 + $0x20] sm:$0xf]
    %v68 = vld [vmem:[%s2 + $0x24] sm:$0xf]
    %v69 = vld [vmem:[%s2 + $0x28] sm:$0xf]
    %v70 = vld [vmem:[%s2 + $0x2c] sm:$0xf]
    %v71 = vld [vmem:[%s2 + $0x30] sm:$0xf]
    %v72 = vld [vmem:[%s2 + $0x34] sm:$0xf]
    %v73 = vld [vmem:[%s2 + $0x38] sm:$0xf]
    %v74 = vld [vmem:[%s2 + $0x3c] sm:$0xf]
    %v91 = vunpack.c.l.b16 %v59
    %v92 = vunpack.c.l.b16 %v60
    %v93 = vunpack.c.l.b16 %v61
    %v94 = vunpack.c.l.b16 %v62
    %v95 = vunpack.c.l.b16 %v63
    %v96 = vunpack.c.l.b16 %v64
    %v97 = vunpack.c.l.b16 %v65
    %v98 = vunpack.c.l.b16 %v66
    %v99 = vunpack.c.l.b16 %v67
    %v100 = vunpack.c.l.b16 %v68
    %v101 = vunpack.c.l.b16 %v69
    %v102 = vunpack.c.l.b16 %v70
    %v103 = vunpack.c.l.b16 %v71
    %v104 = vunpack.c.l.b16 %v72
    %v105 = vunpack.c.l.b16 %v73
    %v106 = vunpack.c.l.b16 %v74
    %v107 = vpack.c.b16 %v92, %v91
    %v108 = vpack.c.b16 %v94, %v93
    %v109 = vpack.c.b16 %v96, %v95
    %v110 = vpack.c.b16 %v98, %v97
    %v111 = vpack.c.b16 %v100, %v99
    %v112 = vpack.c.b16 %v102, %v101
    %v113 = vpack.c.b16 %v104, %v103
    %v114 = vpack.c.b16 %v106, %v105
    %123 = vmatprep.subr.bf16.mxu0 0
    %124 = vmatpush1.bf16.msra.mxu0 %v114
    %125 = vmatprep.subr.bf16.mxu0 0
    %126 = vmatpush1.bf16.msra.mxu0 %v113
    %127 = vmatprep.subr.bf16.mxu0 0
    %128 = vmatpush1.bf16.msra.mxu0 %v112
    %129 = vmatprep.subr.bf16.mxu0 0
    %130 = vmatpush1.bf16.msra.mxu0 %v111
    %131 = vmatprep.subr.bf16.mxu0 0
    %132 = vmatpush1.bf16.msra.mxu0 %v110
    %133 = vmatprep.subr.bf16.mxu0 0
    %134 = vmatpush1.bf16.msra.mxu0 %v109
    %135 = vmatprep.subr.bf16.mxu0 0
    %136 = vmatpush1.bf16.msra.mxu0 %v108
    %137 = vmatprep.subr.bf16.mxu0 0
    %138 = vmatpush1.bf16.msra.mxu0 %v107
    %139 = vmatprep.subr.bf16.mxu0 0
    %140 = vmatpush2.bf16.msra.mxu0 0
    %141 = vmatprep.subr.bf16.mxu0 0
    %142 = vmatpush2.bf16.msra.mxu0 0
    %143 = vmatprep.subr.bf16.mxu0 0
    %144 = vmatpush2.bf16.msra.mxu0 0
    %145 = vmatprep.subr.bf16.mxu0 0
    %146 = vmatpush2.bf16.msra.mxu0 0
    %147 = vmatprep.subr.bf16.mxu0 0
    %148 = vmatpush2.bf16.msra.mxu0 0
    %149 = vmatprep.subr.bf16.mxu0 0
    %150 = vmatpush2.bf16.msra.mxu0 0
    %151 = vmatprep.subr.bf16.mxu0 0
    %152 = vmatpush2.bf16.msra.mxu0 0
    %153 = vmatprep.subr.bf16.mxu0 0
    %154 = vmatpush2.bf16.msra.mxu0 0
    %155 = vmatprep.mubr.bf16.mxu0 0
    %156 = vmatmul.mubr.bf16.gmra.mxu0 %v58
    %v157 = vpop.f32.mrf.mxu0
    %v158 = vadd.f32 0.0, %v157
    %v159 = vpop.f32.mrf.mxu0
    %v160 = vpop.f32.mrf.mxu0
    %v161 = vadd.f32 0.0, %v160
    %v162 = vpop.f32.mrf.mxu0
    %163 = vdwg.mxu0
    %v164 = vpack.c.bf16 %v158, %v158
    %v165 = vpack.c.bf16 %v161, %v161
    loop: start=0, step=1, limit=5
    $region34: #{cross_attention_forward.1} parent=1 // loop_pre_header
      _
    $region35: #{cross_attention_forward.1} parent=1 // loop_header
      %s167 = sphi 0, %s171
      %p168 = scmp.ge.s32.totalorder %s167, 5
      %v172 = vphi 0.0, %v591
      %v173 = vphi 0.0, %v592
    $region36: #{cross_attention_forward.1} parent=1 // loop_header_branch
      %170 = sbr.rel (%p168) target = $region40
    $region37: #{cross_attention_forward.1} parent=1 // loop_body
      %s174 = smul.u32 %s167, 16
      %s175 = smul.addr %s174, 4
      %s176 = scalar_lea.vmem [#allocation2], %s175
      %v177 = vld [vmem:[%s176] sm:$0xf]
      %v178 = vld [vmem:[%s176 + $0x4] sm:$0xf]
      %v179 = vld [vmem:[%s176 + $0x8] sm:$0xf]
      %v180 = vld [vmem:[%s176 + $0xc] sm:$0xf]
      %v181 = vld [vmem:[%s176 + $0x10] sm:$0xf]
      %v182 = vld [vmem:[%s176 + $0x14] sm:$0xf]
      %v183 = vld [vmem:[%s176 + $0x18] sm:$0xf]
      %v184 = vld [vmem:[%s176 + $0x1c] sm:$0xf]
      %v185 = vld [vmem:[%s176 + $0x20] sm:$0xf]
      %v186 = vld [vmem:[%s176 + $0x24] sm:$0xf]
      %v187 = vld [vmem:[%s176 + $0x28] sm:$0xf]
      %v188 = vld [vmem:[%s176 + $0x2c] sm:$0xf]
      %v189 = vld [vmem:[%s176 + $0x30] sm:$0xf]
      %v190 = vld [vmem:[%s176 + $0x34] sm:$0xf]
      %v191 = vld [vmem:[%s176 + $0x38] sm:$0xf]
      %v192 = vld [vmem:[%s176 + $0x3c] sm:$0xf]
      %v209 = vunpack.c.l.b16 %v177
      %v210 = vunpack.c.l.b16 %v178
      %v211 = vunpack.c.l.b16 %v179
      %v212 = vunpack.c.l.b16 %v180
      %v213 = vunpack.c.l.b16 %v181
      %v214 = vunpack.c.l.b16 %v182
      %v215 = vunpack.c.l.b16 %v183
      %v216 = vunpack.c.l.b16 %v184
      %v217 = vunpack.c.l.b16 %v185
      %v218 = vunpack.c.l.b16 %v186
      %v219 = vunpack.c.l.b16 %v187
      %v220 = vunpack.c.l.b16 %v188
      %v221 = vunpack.c.l.b16 %v189
      %v222 = vunpack.c.l.b16 %v190
      %v223 = vunpack.c.l.b16 %v191
      %v224 = vunpack.c.l.b16 %v192
      %v225 = vpack.c.b16 %v210, %v209
      %v226 = vpack.c.b16 %v212, %v211
      %v227 = vpack.c.b16 %v214, %v213
      %v228 = vpack.c.b16 %v216, %v215
      %v229 = vpack.c.b16 %v218, %v217
      %v230 = vpack.c.b16 %v220, %v219
      %v231 = vpack.c.b16 %v222, %v221
      %v232 = vpack.c.b16 %v224, %v223
      %241 = vmatprep.subr.bf16.mxu0 0
      %242 = vmatpush1.bf16.msra.mxu0 %v232
      %243 = vmatprep.subr.bf16.mxu0 0
      %244 = vmatpush1.bf16.msra.mxu0 %v231
      %245 = vmatprep.subr.bf16.mxu0 0
      %246 = vmatpush1.bf16.msra.mxu0 %v230
      %247 = vmatprep.subr.bf16.mxu0 0
      %248 = vmatpush1.bf16.msra.mxu0 %v229
      %249 = vmatprep.subr.bf16.mxu0 0
      %250 = vmatpush1.bf16.msra.mxu0 %v228
      %251 = vmatprep.subr.bf16.mxu0 0
      %252 = vmatpush1.bf16.msra.mxu0 %v227
      %253 = vmatprep.subr.bf16.mxu0 0
      %254 = vmatpush1.bf16.msra.mxu0 %v226
      %255 = vmatprep.subr.bf16.mxu0 0
      %256 = vmatpush1.bf16.msra.mxu0 %v225
      %257 = vmatprep.subr.bf16.mxu0 0
      %258 = vmatpush2.bf16.msra.mxu0 0
      %259 = vmatprep.subr.bf16.mxu0 0
      %260 = vmatpush2.bf16.msra.mxu0 0
      %261 = vmatprep.subr.bf16.mxu0 0
      %262 = vmatpush2.bf16.msra.mxu0 0
      %263 = vmatprep.subr.bf16.mxu0 0
      %264 = vmatpush2.bf16.msra.mxu0 0
      %265 = vmatprep.subr.bf16.mxu0 0
      %266 = vmatpush2.bf16.msra.mxu0 0
      %267 = vmatprep.subr.bf16.mxu0 0
      %268 = vmatpush2.bf16.msra.mxu0 0
      %269 = vmatprep.subr.bf16.mxu0 0
      %270 = vmatpush2.bf16.msra.mxu0 0
      %271 = vmatprep.subr.bf16.mxu0 0
      %272 = vmatpush2.bf16.msra.mxu0 0
      %273 = vmatprep.mubr.bf16.mxu0 0
      %274 = vmatmul.mubr.bf16.gmra.mxu0 %v55
      %v275 = vpop.f32.mrf.mxu0
      %v276 = vadd.f32 0.0, %v275
      %v277 = vpop.f32.mrf.mxu0
      %v278 = vpop.f32.mrf.mxu0
      %v279 = vadd.f32 0.0, %v278
      %v280 = vpop.f32.mrf.mxu0
      %281 = vdwg.mxu0
      %s282 = smul.addr %s174, 4
      %s283 = scalar_lea.vmem [#allocation5], %s282
      %v284 = vld [vmem:[%s283] sm:$0xf]
      %v285 = vld [vmem:[%s283 + $0x4] sm:$0xf]
      %v286 = vld [vmem:[%s283 + $0x8] sm:$0xf]
      %v287 = vld [vmem:[%s283 + $0xc] sm:$0xf]
      %v288 = vld [vmem:[%s283 + $0x10] sm:$0xf]
      %v289 = vld [vmem:[%s283 + $0x14] sm:$0xf]
      %v290 = vld [vmem:[%s283 + $0x18] sm:$0xf]
      %v291 = vld [vmem:[%s283 + $0x1c] sm:$0xf]
      %v292 = vld [vmem:[%s283 + $0x20] sm:$0xf]
      %v293 = vld [vmem:[%s283 + $0x24] sm:$0xf]
      %v294 = vld [vmem:[%s283 + $0x28] sm:$0xf]
      %v295 = vld [vmem:[%s283 + $0x2c] sm:$0xf]
      %v296 = vld [vmem:[%s283 + $0x30] sm:$0xf]
      %v297 = vld [vmem:[%s283 + $0x34] sm:$0xf]
      %v298 = vld [vmem:[%s283 + $0x38] sm:$0xf]
      %v299 = vld [vmem:[%s283 + $0x3c] sm:$0xf]
      %v316 = vunpack.c.l.b16 %v284
      %v317 = vunpack.c.l.b16 %v285
      %v318 = vunpack.c.l.b16 %v286
      %v319 = vunpack.c.l.b16 %v287
      %v320 = vunpack.c.l.b16 %v288
      %v321 = vunpack.c.l.b16 %v289
      %v322 = vunpack.c.l.b16 %v290
      %v323 = vunpack.c.l.b16 %v291
      %v324 = vunpack.c.l.b16 %v292
      %v325 = vunpack.c.l.b16 %v293
      %v326 = vunpack.c.l.b16 %v294
      %v327 = vunpack.c.l.b16 %v295
      %v328 = vunpack.c.l.b16 %v296
      %v329 = vunpack.c.l.b16 %v297
      %v330 = vunpack.c.l.b16 %v298
      %v331 = vunpack.c.l.b16 %v299
      %v332 = vpack.c.b16 %v317, %v316
      %v333 = vpack.c.b16 %v319, %v318
      %v334 = vpack.c.b16 %v321, %v320
      %v335 = vpack.c.b16 %v323, %v322
      %v336 = vpack.c.b16 %v325, %v324
      %v337 = vpack.c.b16 %v327, %v326
      %v338 = vpack.c.b16 %v329, %v328
      %v339 = vpack.c.b16 %v331, %v330
      %348 = vmatprep.subr.bf16.mxu0 0
      %349 = vmatpush1.bf16.msra.mxu0 %v339
      %350 = vmatprep.subr.bf16.mxu0 0
      %351 = vmatpush1.bf16.msra.mxu0 %v338
      %352 = vmatprep.subr.bf16.mxu0 0
      %353 = vmatpush1.bf16.msra.mxu0 %v337
      %354 = vmatprep.subr.bf16.mxu0 0
      %355 = vmatpush1.bf16.msra.mxu0 %v336
      %356 = vmatprep.subr.bf16.mxu0 0
      %357 = vmatpush1.bf16.msra.mxu0 %v335
      %358 = vmatprep.subr.bf16.mxu0 0
      %359 = vmatpush1.bf16.msra.mxu0 %v334
      %360 = vmatprep.subr.bf16.mxu0 0
      %361 = vmatpush1.bf16.msra.mxu0 %v333
      %362 = vmatprep.subr.bf16.mxu0 0
      %363 = vmatpush1.bf16.msra.mxu0 %v332
      %364 = vmatprep.subr.bf16.mxu0 0
      %365 = vmatpush2.bf16.msra.mxu0 0
      %366 = vmatprep.subr.bf16.mxu0 0
      %367 = vmatpush2.bf16.msra.mxu0 0
      %368 = vmatprep.subr.bf16.mxu0 0
      %369 = vmatpush2.bf16.msra.mxu0 0
      %370 = vmatprep.subr.bf16.mxu0 0
      %371 = vmatpush2.bf16.msra.mxu0 0
      %372 = vmatprep.subr.bf16.mxu0 0
      %373 = vmatpush2.bf16.msra.mxu0 0
      %374 = vmatprep.subr.bf16.mxu0 0
      %375 = vmatpush2.bf16.msra.mxu0 0
      %376 = vmatprep.subr.bf16.mxu0 0
      %377 = vmatpush2.bf16.msra.mxu0 0
      %378 = vmatprep.subr.bf16.mxu0 0
      %379 = vmatpush2.bf16.msra.mxu0 0
      %380 = vmatprep.mubr.bf16.mxu0 0
      %381 = vmatmul.mubr.bf16.gmra.mxu0 %v55
      %v382 = vpop.f32.mrf.mxu0
      %v383 = vadd.f32 0.0, %v382
      %v384 = vpop.f32.mrf.mxu0
      %v385 = vpop.f32.mrf.mxu0
      %v386 = vadd.f32 0.0, %v385
      %v387 = vpop.f32.mrf.mxu0
      %388 = vdwg.mxu0
      %v389 = vpack.c.bf16 %v276, %v276
      %v390 = vpack.c.bf16 %v279, %v279
      %v391 = vpack.c.bf16 %v383, %v383
      %v392 = vpack.c.bf16 %v386, %v386
      %393 = vmatprep.subr.bf16.mxu0 0
      %394 = vmatpush1.bf16.xpose.msra.mxu0 0
      %395 = vmatprep.subr.bf16.mxu0 0
      %396 = vmatpush1.bf16.xpose.msra.mxu0 0
      %397 = vmatprep.subr.bf16.mxu0 0
      %398 = vmatpush1.bf16.xpose.msra.mxu0 0
      %399 = vmatprep.subr.bf16.mxu0 0
      %400 = vmatpush1.bf16.xpose.msra.mxu0 0
      %401 = vmatprep.subr.bf16.mxu0 0
      %402 = vmatpush1.bf16.xpose.msra.mxu0 0
      %403 = vmatprep.subr.bf16.mxu0 0
      %404 = vmatpush1.bf16.xpose.msra.mxu0 0
      %405 = vmatprep.subr.bf16.mxu0 0
      %406 = vmatpush1.bf16.xpose.msra.mxu0 0
      %407 = vmatprep.subr.bf16.mxu0 0
      %408 = vmatpush1.bf16.xpose.msra.mxu0 %v389
      %409 = vmatprep.subr.bf16.mxu0 0
      %410 = vmatpush2.bf16.xpose.msra.mxu0 0
      %411 = vmatprep.subr.bf16.mxu0 0
      %412 = vmatpush2.bf16.xpose.msra.mxu0 0
      %413 = vmatprep.subr.bf16.mxu0 0
      %414 = vmatpush2.bf16.xpose.msra.mxu0 0
      %415 = vmatprep.subr.bf16.mxu0 0
      %416 = vmatpush2.bf16.xpose.msra.mxu0 0
      %417 = vmatprep.subr.bf16.mxu0 0
      %418 = vmatpush2.bf16.xpose.msra.mxu0 0
      %419 = vmatprep.subr.bf16.mxu0 0
      %420 = vmatpush2.bf16.xpose.msra.mxu0 0
      %421 = vmatprep.subr.bf16.mxu0 0
      %422 = vmatpush2.bf16.xpose.msra.mxu0 0
      %423 = vmatprep.subr.bf16.mxu0 0
      %424 = vmatpush2.bf16.xpose.msra.mxu0 0
      %425 = vmatprep.mubr.bf16.mxu0 0
      %426 = vmatmul.mubr.bf16.gmra.mxu0 %v164
      %v427 = vpop.f32.mrf.mxu0
      %v428 = vadd.f32 0.0, %v427
      %v429 = vpop.f32.mrf.mxu0
      %v430 = vpop.f32.mrf.mxu0
      %v431 = vpop.f32.mrf.mxu0
      %432 = vdwg.mxu0
      %433 = vmatprep.subr.bf16.mxu0 0
      %434 = vmatpush1.bf16.xpose.msra.mxu0 0
      %435 = vmatprep.subr.bf16.mxu0 0
      %436 = vmatpush1.bf16.xpose.msra.mxu0 0
      %437 = vmatprep.subr.bf16.mxu0 0
      %438 = vmatpush1.bf16.xpose.msra.mxu0 0
      %439 = vmatprep.subr.bf16.mxu0 0
      %440 = vmatpush1.bf16.xpose.msra.mxu0 0
      %441 = vmatprep.subr.bf16.mxu0 0
      %442 = vmatpush1.bf16.xpose.msra.mxu0 0
      %443 = vmatprep.subr.bf16.mxu0 0
      %444 = vmatpush1.bf16.xpose.msra.mxu0 0
      %445 = vmatprep.subr.bf16.mxu0 0
      %446 = vmatpush1.bf16.xpose.msra.mxu0 0
      %447 = vmatprep.subr.bf16.mxu0 0
      %448 = vmatpush1.bf16.xpose.msra.mxu0 %v390
      %449 = vmatprep.subr.bf16.mxu0 0
      %450 = vmatpush2.bf16.xpose.msra.mxu0 0
      %451 = vmatprep.subr.bf16.mxu0 0
      %452 = vmatpush2.bf16.xpose.msra.mxu0 0
      %453 = vmatprep.subr.bf16.mxu0 0
      %454 = vmatpush2.bf16.xpose.msra.mxu0 0
      %455 = vmatprep.subr.bf16.mxu0 0
      %456 = vmatpush2.bf16.xpose.msra.mxu0 0
      %457 = vmatprep.subr.bf16.mxu0 0
      %458 = vmatpush2.bf16.xpose.msra.mxu0 0
      %459 = vmatprep.subr.bf16.mxu0 0
      %460 = vmatpush2.bf16.xpose.msra.mxu0 0
      %461 = vmatprep.subr.bf16.mxu0 0
      %462 = vmatpush2.bf16.xpose.msra.mxu0 0
      %463 = vmatprep.subr.bf16.mxu0 0
      %464 = vmatpush2.bf16.xpose.msra.mxu0 0
      %465 = vmatprep.mubr.bf16.mxu0 0
      %466 = vmatmul.mubr.bf16.gmra.mxu0 %v165
      %v467 = vpop.f32.mrf.mxu0
      %v468 = vadd.f32 0.0, %v467
      %v469 = vpop.f32.mrf.mxu0
      %v470 = vpop.f32.mrf.mxu0
      %v471 = vpop.f32.mrf.mxu0
      %472 = vdwg.mxu0
      %vm473 = vcmask 64512
      %v474 = vsel %vm473, %v428, -inf
      %475 = vmax.xlane.f32.xlu0 %v474
      %v476 = vpop.xlane.xlu0 %475
      %v477 = vsel %vm473, %v468, -inf
      %478 = vmax.xlane.f32.xlu0 %v477
      %v479 = vpop.xlane.xlu0 %478
      %v480 = vsub.f32 %v428, %v476
      %v481 = vsub.f32 %v468, %v479
      %v482 = vmul.f32 %v480, 1.442695
      %v483 = vpow.pop %v482
      %v484 = vmul.f32 %v481, 1.442695
      %v485 = vpow.pop %v484
      %v486 = vsel %vm473, %v483, 0.0
      %487 = vadd.xlane.f32.xlu0 %v486
      %v488 = vpop.xlane.xlu0 %487
      %v489 = vsel %vm473, %v485, 0.0
      %490 = vadd.xlane.f32.xlu0 %v489
      %v491 = vpop.xlane.xlu0 %490
      %v492 = vrcp.pop %v488
      %v493 = vrcp.pop %v491
      %v494 = vmul.f32 %v483, %v492
      %v495 = vmul.f32 %v485, %v493
      %v496 = vpack.c.bf16 %v494, %v494
      %v497 = vpack.c.bf16 %v495, %v495
      %v499 = vsel %vm473, %v496, 0
      %vm501 = vcmask 1043456
      %v503 = vsel %vm501, %v391, 0
      %505 = vmatprep.subr.bf16.mxu0 0
      %506 = vmatpush1.bf16.msra.mxu0 0
      %507 = vmatprep.subr.bf16.mxu0 0
      %508 = vmatpush1.bf16.msra.mxu0 0
      %509 = vmatprep.subr.bf16.mxu0 0
      %510 = vmatpush1.bf16.msra.mxu0 0
      %511 = vmatprep.subr.bf16.mxu0 0
      %512 = vmatpush1.bf16.msra.mxu0 0
      %513 = vmatprep.subr.bf16.mxu0 0
      %514 = vmatpush1.bf16.msra.mxu0 0
      %515 = vmatprep.subr.bf16.mxu0 0
      %516 = vmatpush1.bf16.msra.mxu0 0
      %517 = vmatprep.subr.bf16.mxu0 0
      %518 = vmatpush1.bf16.msra.mxu0 0
      %519 = vmatprep.subr.bf16.mxu0 0
      %520 = vmatpush1.bf16.msra.mxu0 %v503
      %521 = vmatprep.subr.bf16.mxu0 0
      %522 = vmatpush2.bf16.msra.mxu0 0
      %523 = vmatprep.subr.bf16.mxu0 0
      %524 = vmatpush2.bf16.msra.mxu0 0
      %525 = vmatprep.subr.bf16.mxu0 0
      %526 = vmatpush2.bf16.msra.mxu0 0
      %527 = vmatprep.subr.bf16.mxu0 0
      %528 = vmatpush2.bf16.msra.mxu0 0
      %529 = vmatprep.subr.bf16.mxu0 0
      %530 = vmatpush2.bf16.msra.mxu0 0
      %531 = vmatprep.subr.bf16.mxu0 0
      %532 = vmatpush2.bf16.msra.mxu0 0
      %533 = vmatprep.subr.bf16.mxu0 0
      %534 = vmatpush2.bf16.msra.mxu0 0
      %535 = vmatprep.subr.bf16.mxu0 0
      %536 = vmatpush2.bf16.msra.mxu0 0
      %537 = vmatprep.mubr.bf16.mxu0 0
      %538 = vmatmul.mubr.bf16.gmra.mxu0 %v499
      %v539 = vpop.f32.mrf.mxu0
      %v540 = vadd.f32 0.0, %v539
      %v541 = vpop.f32.mrf.mxu0
      %v542 = vpop.f32.mrf.mxu0
      %v543 = vpop.f32.mrf.mxu0
      %544 = vdwg.mxu0
      %v546 = vsel %vm473, %v497, 0
      %v549 = vsel %vm501, %v392, 0
      %551 = vmatprep.subr.bf16.mxu0 0
      %552 = vmatpush1.bf16.msra.mxu0 0
      %553 = vmatprep.subr.bf16.mxu0 0
      %554 = vmatpush1.bf16.msra.mxu0 0
      %555 = vmatprep.subr.bf16.mxu0 0
      %556 = vmatpush1.bf16.msra.mxu0 0
      %557 = vmatprep.subr.bf16.mxu0 0
      %558 = vmatpush1.bf16.msra.mxu0 0
      %559 = vmatprep.subr.bf16.mxu0 0
      %560 = vmatpush1.bf16.msra.mxu0 0
      %561 = vmatprep.subr.bf16.mxu0 0
      %562 = vmatpush1.bf16.msra.mxu0 0
      %563 = vmatprep.subr.bf16.mxu0 0
      %564 = vmatpush1.bf16.msra.mxu0 0
      %565 = vmatprep.subr.bf16.mxu0 0
      %566 = vmatpush1.bf16.msra.mxu0 %v549
      %567 = vmatprep.subr.bf16.mxu0 0
      %568 = vmatpush2.bf16.msra.mxu0 0
      %569 = vmatprep.subr.bf16.mxu0 0
      %570 = vmatpush2.bf16.msra.mxu0 0
      %571 = vmatprep.subr.bf16.mxu0 0
      %572 = vmatpush2.bf16.msra.mxu0 0
      %573 = vmatprep.subr.bf16.mxu0 0
      %574 = vmatpush2.bf16.msra.mxu0 0
      %575 = vmatprep.subr.bf16.mxu0 0
      %576 = vmatpush2.bf16.msra.mxu0 0
      %577 = vmatprep.subr.bf16.mxu0 0
      %578 = vmatpush2.bf16.msra.mxu0 0
      %579 = vmatprep.subr.bf16.mxu0 0
      %580 = vmatpush2.bf16.msra.mxu0 0
      %581 = vmatprep.subr.bf16.mxu0 0
      %582 = vmatpush2.bf16.msra.mxu0 0
      %583 = vmatprep.mubr.bf16.mxu0 0
      %584 = vmatmul.mubr.bf16.gmra.mxu0 %v546
      %v585 = vpop.f32.mrf.mxu0
      %v586 = vadd.f32 0.0, %v585
      %v587 = vpop.f32.mrf.mxu0
      %v588 = vpop.f32.mrf.mxu0
      %v589 = vpop.f32.mrf.mxu0
      %590 = vdwg.mxu0
      %v591 = vadd.f32 %v172, %v540
      %v592 = vadd.f32 %v173, %v586
    $region38: #{cross_attention_forward.1} parent=1 // loop_footer
      %s171 = sadd.s32 1, %s167
    $region39: #{cross_attention_forward.1} parent=1 // loop_footer_branch
      %166 = sbr.rel target = $region35
    $region40: #{cross_attention_forward.1} parent=1 // loop_exit
      _
    %v593 = vld [vmem:[%s5] sm:$0x1]
    %v595 = vlaneseq
    %v596 = vshrl.u32 %v595, 7
    %v597 = vsub.s32 0, %v596
    %v598 = vrot.slane %v593, %v597
    %v600 = vadd.f32 %v172, %v598
    %v601 = vadd.f32 %v173, %v598
    %v602 = vadd.f32 %v600, %v53
    %v603 = vadd.f32 %v601, %v54
    %604 = vst [vmem:[#allocation7] sm:$0xff] %v602
    %605 = vst [vmem:[#allocation7 + $0x8] sm:$0xff] %v603
    // Predicated region
    $region41: #{cross_attention_forward.1} parent=1 // pred_check
      _
    $region42: #{cross_attention_forward.1} parent=1 // pred_check_branch
      %607 = sbr.rel (0) target = $region44
    $region43: #{cross_attention_forward.1} parent=1 // pred_region
      %s609 = ssub.s32 256, 256
      %610 = vsyncadd [#allocation4], %s609
      %s611 = sshll.u32 [#allocation7], 4
      %s612 = int_to_ptr.vmem [resolvable:$true] %s611
      %617 = dma.vmem_to_hbm [thread:$0]  %s612, 256, %s6, [#allocation4], 128, 128, 8
    $region44: #{cross_attention_forward.1} parent=1 // pred_fallthru
      _
    // Predicated region
    $region45: #{cross_attention_forward.1} parent=1 // pred_check
      _
    $region46: #{cross_attention_forward.1} parent=1 // pred_check_branch
      %619 = sbr.rel (0) target = $region48
    $region47: #{cross_attention_forward.1} parent=1 // pred_region
      %620 = dma.done [#allocation4], 256
    $region48: #{cross_attention_forward.1} parent=1 // pred_fallthru
      _
    %621 = vsyncpa [#allocation3], 1
    %622 = vsyncpa [#allocation6], 1
    %623 = vsyncpa [#allocation4], 1

</llo_original>
